<compile_context>
chip_gen: v6e
topology: v6e:2x2x1
jax: 0.10.0
libtpu: 0.0.40
codegen_flags: <defaults>
</compile_context>

<pallas_src>
import functools

import jax
import jax.numpy as jnp
from jax.experimental import pallas as pl
from jax.experimental.pallas import tpu as pltpu


def _layer_kernel(x_ref, w_ref, b_ref, o_ref, acc_ref):
    k = pl.program_id(2)

    # Zero the accumulator at the start of the reduction.
    @pl.when(k == 0)
    def _():
        acc_ref[...] = jnp.zeros_like(acc_ref)

    # Inner op self.x(x): MXU matmul, f32 accumulation.
    acc_ref[...] += jnp.dot(
        x_ref[...], w_ref[...], preferred_element_type=jnp.float32
    )

    # Epilogue: bias + outer op self.f(.) = ReLU, applied once per output tile.
    @pl.when(k == pl.num_programs(2) - 1)
    def _():
        y = acc_ref[...] + b_ref[...].astype(jnp.float32)
        o_ref[...] = jnp.maximum(y, 0.0).astype(o_ref.dtype)


def _round_up(x, m):
    return ((x + m - 1) // m) * m


def _choose_tile(dim, candidates):
    for c in candidates:
        if dim % c == 0:
            return c
    return dim  # full-dim block is always layout-legal


@functools.partial(jax.jit, static_argnames=("compute_dtype",))
def layer_forward(x, weight, bias, *, compute_dtype=None):
    """forward(x) = relu(x @ weight + bias), fused tiled Pallas kernel.

    x:      [B, K]
    weight: [K, N]   (W^T relative to torch.nn.Linear's [out, in] storage)
    bias:   [N]
    """
    B, K = x.shape
    K2, N = weight.shape
    assert K == K2 and bias.shape == (N,)
    out_dtype = x.dtype

    if compute_dtype is not None:
        x = x.astype(compute_dtype)
        weight = weight.astype(compute_dtype)

    # ---- tile selection -------------------------------------------------
    # Lane-dense N tiles, big K tiles; M padded/tiled to sublane alignment.
    tn = _choose_tile(N, (512, 256, 128))
    tk = _choose_tile(K, (512, 256, 128))
    if B >= 256 and B % 256 == 0:
        tm, Bp = 256, B
    elif B >= 128:
        tm = 128
        Bp = _round_up(B, 128)
    else:
        tm = max(8, _round_up(B, 8))
        Bp = tm

    if Bp != B:
        # TODO(synk): for tiny persistent batches, stack multiple calls instead
        # of zero-padding so the MXU rows aren't wasted.
        x = jnp.pad(x, ((0, Bp - B), (0, 0)))

    grid = (Bp // tm, N // tn, pl.cdiv(K, tk))

    cost = pl.CostEstimate(
        flops=2 * B * K * N,
        transcendentals=0,
        bytes_accessed=(
            x.size * x.dtype.itemsize
            + weight.size * weight.dtype.itemsize
            + bias.size * bias.dtype.itemsize
            + B * N * jnp.dtype(out_dtype).itemsize
        ),
    )

    out = pl.pallas_call(
        _layer_kernel,
        out_shape=jax.ShapeDtypeStruct((Bp, N), out_dtype),
        grid_spec=pltpu.PrefetchScalarGridSpec(
            num_scalar_prefetch=0,
            grid=grid,
            in_specs=[
                pl.BlockSpec((tm, tk), lambda i, j, k: (i, k)),   # x tile
                pl.BlockSpec((tk, tn), lambda i, j, k: (k, j)),   # weight tile
                pl.BlockSpec((1, tn), lambda i, j, k: (0, j)),    # bias tile
            ],
            out_specs=pl.BlockSpec((tm, tn), lambda i, j, k: (i, j)),
            scratch_shapes=[pltpu.VMEM((tm, tn), jnp.float32)],
        ),
        compiler_params=pltpu.CompilerParams(
            dimension_semantics=("parallel", "parallel", "arbitrary"),
        ),
        cost_estimate=cost,
    )(x, weight, bias.reshape(1, N))

    return out[:B] if Bp != B else out


def reference_forward(x, weight, bias):
    # Pure-JAX reference of Layer.forward with Linear + ReLU.
    return jnp.maximum(x @ weight + bias[None, :], 0.0)


if __name__ == "__main__":
    key = jax.random.PRNGKey(0)
    k_x, k_w, k_b = jax.random.split(key, 3)

    # Shapes chosen so the (M, N, K) grid is genuinely tiled: grid = (3, 3, 2).
    B, IN, OUT = 384, 1024, 768
    x = jax.random.normal(k_x, (B, IN), dtype=jnp.float32)
    weight = jax.random.normal(k_w, (IN, OUT), dtype=jnp.float32) * 0.05
    bias = jax.random.normal(k_b, (OUT,), dtype=jnp.float32) * 0.1

    ref = reference_forward(x, weight, bias)

    # f32 path — tight tolerance.
    out = layer_forward(x, weight, bias)
    jax.block_until_ready(out)
    assert out.shape == (B, OUT)
    assert jnp.allclose(out, ref, atol=1e-4, rtol=1e-4)

    # bf16 compute path (v6e/v7x MXU), f32 accumulation — loose tolerance.
    out_bf16 = layer_forward(x, weight, bias, compute_dtype=jnp.bfloat16)
    jax.block_until_ready(out_bf16)
    assert out_bf16.shape == (B, OUT)
    assert jnp.allclose(out_bf16, ref, atol=1e-1, rtol=5e-2)

    # Non-tile-aligned small batch exercises the M-padding path.
    x_small = x[:20]
    out_small = layer_forward(x_small, weight, bias)
    jax.block_until_ready(out_small)
    assert out_small.shape == (20, OUT)
    assert jnp.allclose(out_small, ref[:20], atol=1e-4, rtol=1e-4)

    print("KERNEL_OK")
</pallas_src>

<mosaic_0001>
module attributes {stable_mosaic.version = 11 : i64} {
  func.func @_layer_kernel(%arg0: i32, %arg1: i32, %arg2: i32, %arg3: memref<128x512xf32, #tpu.memory_space<vmem>>, %arg4: memref<512x256xf32, #tpu.memory_space<vmem>>, %arg5: memref<1x256xf32, #tpu.memory_space<vmem>>, %arg6: memref<128x256xf32, #tpu.memory_space<vmem>>, %arg7: memref<128x256xf32, #tpu.memory_space<vmem>>) attributes {dimension_semantics = [#tpu.dimension_semantics<parallel>, #tpu.dimension_semantics<parallel>, #tpu.dimension_semantics<arbitrary>], iteration_bounds = array<i64: 3, 3, 2>, scalar_prefetch = 0 : i64, scratch_operands = 1 : i64, tpu.core_type = #tpu.core_type<tc>, window_params = [{transform_indices = @transform_0, window_bounds = array<i64: 128, 512>}, {transform_indices = @transform_1, window_bounds = array<i64: 512, 256>}, {transform_indices = @transform_2, window_bounds = array<i64: 1, 256>}, {transform_indices = @transform_3, window_bounds = array<i64: 128, 256>}]} {
    %c0_i32 = arith.constant 0 : i32
    %0 = arith.cmpi eq, %arg2, %c0_i32 : i32
    %1 = arith.extui %0 : i1 to i32
    %c0_i32_0 = arith.constant 0 : i32
    %2 = arith.cmpi ne, %1, %c0_i32_0 : i32
    scf.if %2 {
      %cst_9 = arith.constant 0.000000e+00 : f32
      %12 = vector.broadcast %cst_9 : f32 to vector<128x256xf32>
      %c0_10 = arith.constant 0 : index
      %c0_11 = arith.constant 0 : index
      %13 = vector.load %arg7[%c0_10, %c0_11] : memref<128x256xf32, #tpu.memory_space<vmem>>, vector<128x256xf32>
      tpu.vector_store %arg7[%c0_10, %c0_11], %12 {strides = array<i32>} : memref<128x256xf32, #tpu.memory_space<vmem>>, vector<128x256xf32>,
    } else {
    }
    %c0 = arith.constant 0 : index
    %c0_1 = arith.constant 0 : index
    %3 = vector.load %arg7[%c0, %c0_1] : memref<128x256xf32, #tpu.memory_space<vmem>>, vector<128x256xf32>
    %c0_2 = arith.constant 0 : index
    %c0_3 = arith.constant 0 : index
    %4 = vector.load %arg3[%c0_2, %c0_3] : memref<128x512xf32, #tpu.memory_space<vmem>>, vector<128x512xf32>
    %c0_4 = arith.constant 0 : index
    %c0_5 = arith.constant 0 : index
    %5 = vector.load %arg4[%c0_4, %c0_5] : memref<512x256xf32, #tpu.memory_space<vmem>>, vector<512x256xf32>
    %cst = arith.constant dense<0.000000e+00> : vector<128x256xf32>
    %6 = tpu.matmul %4, %5, %cst {dimension_numbers = #tpu.dot_dimension_numbers<[1], [0], [0], [1], [0, 0, 1, 1], [], []>} : vector<128x512xf32>, vector<512x256xf32>, vector<128x256xf32> -> vector<128x256xf32>
    %7 = arith.addf %3, %6 : vector<128x256xf32>
    %c0_6 = arith.constant 0 : index
    %c0_7 = arith.constant 0 : index
    %8 = vector.load %arg7[%c0_6, %c0_7] : memref<128x256xf32, #tpu.memory_space<vmem>>, vector<128x256xf32>
    tpu.vector_store %arg7[%c0_6, %c0_7], %7 {strides = array<i32>} : memref<128x256xf32, #tpu.memory_space<vmem>>, vector<128x256xf32>,
    %c1_i32 = arith.constant 1 : i32
    %9 = arith.cmpi eq, %arg2, %c1_i32 : i32
    %10 = arith.extui %9 : i1 to i32
    %c0_i32_8 = arith.constant 0 : i32
    %11 = arith.cmpi ne, %10, %c0_i32_8 : i32
    scf.if %11 {
      %c0_9 = arith.constant 0 : index
      %c0_10 = arith.constant 0 : index
      %12 = vector.load %arg7[%c0_9, %c0_10] : memref<128x256xf32, #tpu.memory_space<vmem>>, vector<128x256xf32>
      %c0_11 = arith.constant 0 : index
      %c0_12 = arith.constant 0 : index
      %13 = vector.load %arg5[%c0_11, %c0_12] : memref<1x256xf32, #tpu.memory_space<vmem>>, vector<1x256xf32>
      %14 = vector.broadcast %13 : vector<1x256xf32> to vector<128x256xf32>
      %15 = arith.addf %12, %14 : vector<128x256xf32>
      %cst_13 = arith.constant 0.000000e+00 : f32
      %16 = vector.broadcast %cst_13 : f32 to vector<128x256xf32>
      %17 = arith.maximumf %15, %16 : vector<128x256xf32>
      %c0_14 = arith.constant 0 : index
      %c0_15 = arith.constant 0 : index
      %18 = vector.load %arg6[%c0_14, %c0_15] : memref<128x256xf32, #tpu.memory_space<vmem>>, vector<128x256xf32>
      tpu.vector_store %arg6[%c0_14, %c0_15], %17 {strides = array<i32>} : memref<128x256xf32, #tpu.memory_space<vmem>>, vector<128x256xf32>,
    } else {
    }
    return
  }
  func.func @transform_0(%arg0: i32, %arg1: i32, %arg2: i32) -> (i32, i32) {
    %c0_i32 = arith.constant 0 : i32
    return %arg0, %arg2 : i32, i32
  }
  func.func @transform_1(%arg0: i32, %arg1: i32, %arg2: i32) -> (i32, i32) {
    %c0_i32 = arith.constant 0 : i32
    return %arg2, %arg1 : i32, i32
  }
  func.func @transform_2(%arg0: i32, %arg1: i32, %arg2: i32) -> (i32, i32) {
    %c0_i32 = arith.constant 0 : i32
    %c0_i32_0 = arith.constant 0 : i32
    return %c0_i32, %arg1 : i32, i32
  }
  func.func @transform_3(%arg0: i32, %arg1: i32, %arg2: i32) -> (i32, i32) {
    %c0_i32 = arith.constant 0 : i32
    return %arg0, %arg1 : i32, i32
  }
}

</mosaic_0001>

<llo_original>
// kernel: layer_forward.1
$region0: #{layer_forward.1}
  #allocation0 [shape = 'u32[]', space=smem, size = 0x4, offset = 0x4, fixed_abs, tag = 'smem constant byte address 0x4 - core index']
  #allocation1 [shape = 'u32[144,128]{1,0:T(1,128)}', space=vmem, size = 0x12000, scoped, tag = 'internal scratch']
  #allocation2 [shape = 'f32[128,256]{1,0:T(8,128)}', space=vmem, size = 0x20000, scoped, tag = 'scratch operand']
  %s0 = inlined_call_operand.hbm [shape: f32[384,1024], index: 0, kind: input, shape index: {}]
  %s1 = inlined_call_operand.hbm [shape: f32[1024,768], index: 1, kind: input, shape index: {}]
  %s2 = inlined_call_operand.vmem [shape: f32[1,768], index: 2, kind: input, shape index: {}]
  %s3 = inlined_call_operand.hbm [shape: f32[384,768], index: 3, kind: output, shape index: {}]
  %s4 = sld [smem:[#allocation0]]
  $region61: #{layer_forward.1} parent=0
    _
  %s6 = ssub.s32 1, %s4
  %s7 = scalar_select 0, %s6, %s4
  $region1: #{layer_forward.1} parent=0
    #allocation3 [shape = 'u8[524288]{0}', space=vmem, size = 0x80000, scoped, tag = 'input window, operand 0']
    #allocation4 [shape = 's32[2]{0}', space=sflag, size = 0x8, scoped, tag = 'scoped memory for layer_forward.1']
    #allocation5 [shape = 's32[2]{0}', space=sflag, size = 0x8, scoped, tag = 'scoped memory for layer_forward.1']
    #allocation6 [shape = 'u8[1048576]{0}', space=vmem, size = 0x100000, scoped, tag = 'input window, operand 1']
    #allocation7 [shape = 's32[2]{0}', space=sflag, size = 0x8, scoped, tag = 'scoped memory for layer_forward.1']
    #allocation8 [shape = 'u8[262144]{0}', space=vmem, size = 0x40000, scoped, tag = 'output window, operand 0']
    %8 = vsyncpa [#allocation4], 0
    %s9 = scalar_lea.sflag [#allocation4], 1
    %10 = vsyncpa %s9, 0
    %11 = vsyncpa [#allocation7], 0
    %s12 = scalar_lea.sflag [#allocation7], 1
    %13 = vsyncpa %s12, 0
    %14 = vsyncpa [#allocation5], 0
    %s15 = scalar_lea.sflag [#allocation5], 1
    %16 = vsyncpa %s15, 0
    loop: start=0, step=1, limit=20
    $region2: #{layer_forward.1} parent=1 // loop_pre_header
      _
    $region3: #{layer_forward.1} parent=1 // loop_header
      %s18 = sphi 0, %s22
      %p19 = scmp.ge.s32.totalorder %s18, 20
      %s25 = sphi 0, %s44
      %s26 = sphi 0, %s40
      %s27 = sphi 0, %s36
      %s28 = sphi 0, %s25
      %s29 = sphi 0, %s26
      %s30 = sphi 0, %s27
      %s31 = sphi 0, %s28
      %s32 = sphi 0, %s29
      %s33 = sphi 0, %s30
      %s49 = sphi 0, %s51
      %s52 = sphi 0, %s49
      %s53 = sphi 0, %s52
      %s69 = sphi 0, %s53
      %s77 = sphi 0, %s79
      %s80 = sphi 0, %s77
      %s81 = sphi 0, %s80
      %s97 = sphi 0, %s81
      %s103 = sphi 0, %s105
      %s106 = sphi 0, %s103
      %s107 = sphi 0, %s106
      %s123 = sphi 0, %s107
      %s131 = sphi 0, %s133
      %s134 = sphi 0, %s131
      %s135 = sphi 0, %s134
      %s151 = sphi 0, %s135
    $region4: #{layer_forward.1} parent=1 // loop_header_branch
      %21 = sbr.rel (%p19) target = $region8
    $region5: #{layer_forward.1} parent=1 // loop_body
      %s23 = ssub.s32 %s18, 1
      %s24 = ssub.s32 %s18, 2
      %s34 = sadd.s32 1, %s27
      %p35 = scmp.ge.s32.totalorder %s34, 2
      %s36 = scalar_select %p35, 0, %s34
      %s37 = sadd.s32 1, %s26
      %s38 = scalar_select %p35, %s37, %s26
      %p39 = scmp.ge.s32.totalorder %s38, 3
      %s40 = scalar_select %p39, 0, %s38
      %s41 = sadd.s32 1, %s25
      %s42 = scalar_select %p39, %s41, %s25
      %p43 = scmp.ge.s32.totalorder %s42, 3
      %s44 = scalar_select %p43, 0, %s42
      %s45 = ssub.s32 %s25, %s44
      %s46 = ssub.s32 %s27, %s36
      %s47 = sor.u32 %s45, %s46
      %p48 = scmp.eq.s32.totalorder %s47, 0
      %s50 = sadd.s32 %s49, 1
      %s51 = scalar_select %p48, %s49, %s50
      %p54 = pneg %p48
      %p55 = scmp.eq.s32.totalorder %s18, 17
      %p56 = por %p54, %p55
      %p57 = scmp.ne.s32.totalorder %s49, %s52
      %p58 = scmp.eq.s32.totalorder %s18, 0
      %p59 = por %p57, %p58
      %p60 = scmp.ne.s32.totalorder %s49, %s52
      %p61 = scmp.eq.s32.totalorder %s23, 17
      %p62 = por %p60, %p61
      %p63 = scmp.ne.s32.totalorder %s52, %s53
      %p64 = scmp.eq.s32.totalorder %s23, 0
      %p65 = por %p63, %p64
      %p66 = scmp.ne.s32.totalorder %s52, %s53
      %p67 = scmp.eq.s32.totalorder %s24, 17
      %p68 = por %p66, %p67
      %p70 = scmp.ne.s32.totalorder %s53, %s69
      %p71 = scmp.eq.s32.totalorder %s24, 0
      %p72 = por %p70, %p71
      %s73 = ssub.s32 %s27, %s36
      %s74 = ssub.s32 %s26, %s40
      %s75 = sor.u32 %s73, %s74
      %p76 = scmp.eq.s32.totalorder %s75, 0
      %s78 = sadd.s32 %s77, 1
      %s79 = scalar_select %p76, %s77, %s78
      %p82 = pneg %p76
      %p83 = scmp.eq.s32.totalorder %s18, 17
      %p84 = por %p82, %p83
      %p85 = scmp.ne.s32.totalorder %s77, %s80
      %p86 = scmp.eq.s32.totalorder %s18, 0
      %p87 = por %p85, %p86
      %p88 = scmp.ne.s32.totalorder %s77, %s80
      %p89 = scmp.eq.s32.totalorder %s23, 17
      %p90 = por %p88, %p89
      %p91 = scmp.ne.s32.totalorder %s80, %s81
      %p92 = scmp.eq.s32.totalorder %s23, 0
      %p93 = por %p91, %p92
      %p94 = scmp.ne.s32.totalorder %s80, %s81
      %p95 = scmp.eq.s32.totalorder %s24, 17
      %p96 = por %p94, %p95
      %p98 = scmp.ne.s32.totalorder %s81, %s97
      %p99 = scmp.eq.s32.totalorder %s24, 0
      %p100 = por %p98, %p99
      %s101 = ssub.s32 %s26, %s40
      %p102 = scmp.eq.s32.totalorder %s101, 0
      %s104 = sadd.s32 %s103, 1
      %s105 = scalar_select %p102, %s103, %s104
      %p108 = pneg %p102
      %p109 = scmp.eq.s32.totalorder %s18, 17
      %p110 = por %p108, %p109
      %p111 = scmp.ne.s32.totalorder %s103, %s106
      %p112 = scmp.eq.s32.totalorder %s18, 0
      %p113 = por %p111, %p112
      %p114 = scmp.ne.s32.totalorder %s103, %s106
      %p115 = scmp.eq.s32.totalorder %s23, 17
      %p116 = por %p114, %p115
      %p117 = scmp.ne.s32.totalorder %s106, %s107
      %p118 = scmp.eq.s32.totalorder %s23, 0
      %p119 = por %p117, %p118
      %p120 = scmp.ne.s32.totalorder %s106, %s107
      %p121 = scmp.eq.s32.totalorder %s24, 17
      %p122 = por %p120, %p121
      %p124 = scmp.ne.s32.totalorder %s107, %s123
      %p125 = scmp.eq.s32.totalorder %s24, 0
      %p126 = por %p124, %p125
      %s127 = ssub.s32 %s25, %s44
      %s128 = ssub.s32 %s26, %s40
      %s129 = sor.u32 %s127, %s128
      %p130 = scmp.eq.s32.totalorder %s129, 0
      %s132 = sadd.s32 %s131, 1
      %s133 = scalar_select %p130, %s131, %s132
      %p136 = pneg %p130
      %p137 = scmp.eq.s32.totalorder %s18, 17
      %p138 = por %p136, %p137
      %p139 = scmp.ne.s32.totalorder %s131, %s134
      %p140 = scmp.eq.s32.totalorder %s18, 0
      %p141 = por %p139, %p140
      %p142 = scmp.ne.s32.totalorder %s131, %s134
      %p143 = scmp.eq.s32.totalorder %s23, 17
      %p144 = por %p142, %p143
      %p145 = scmp.ne.s32.totalorder %s134, %s135
      %p146 = scmp.eq.s32.totalorder %s23, 0
      %p147 = por %p145, %p146
      %p148 = scmp.ne.s32.totalorder %s134, %s135
      %p149 = scmp.eq.s32.totalorder %s24, 17
      %p150 = por %p148, %p149
      %p152 = scmp.ne.s32.totalorder %s135, %s151
      %p153 = scmp.eq.s32.totalorder %s24, 0
      %p154 = por %p152, %p153
      %p155 = scmp.le.s32.totalorder 1, %s18
      %p156 = scmp.lt.s32.totalorder %s18, 19
      %p157 = pnand %p155, %p156
      %p158 = pneg %p157
      // Predicated region
      $region9: #{layer_forward.1} parent=5 // pred_check
        _
      $region10: #{layer_forward.1} parent=5 // pred_check_branch
        %160 = sbr.rel (%p157) target = $region12
      $region11: #{layer_forward.1} parent=5 // pred_region
        %s161 = ssub.s32 %s18, 1
      $region12: #{layer_forward.1} parent=5 // pred_fallthru
        _
      %p162 = scmp.lt.s32.totalorder %s18, 18
      // Predicated region
      $region13: #{layer_forward.1} parent=5 // pred_check
        %p163 = pneg %p162
      $region14: #{layer_forward.1} parent=5 // pred_check_branch
        %165 = sbr.rel (%p163) target = $region16
      $region15: #{layer_forward.1} parent=5 // pred_region
        // Predicated region
        $region17: #{layer_forward.1} parent=15 // pred_check
          %p166 = pneg %p59
        $region18: #{layer_forward.1} parent=15 // pred_check_branch
          %168 = sbr.rel (%p166) target = $region20
        $region19: #{layer_forward.1} parent=15 // pred_region
          %s169 = sand.u32 %s49, 1
          %s170 = scalar_lea.sflag [#allocation4], %s169
          %s171 = sand.u32 %s49, 1
          %s172 = smul.addr %s171, 512
          %s173 = scalar_lea.vmem [#allocation3], %s172
          %s174 = smul.u32 16, %s25
          %s175 = smul.u32 4, %s27
          %s177 = ssub.s32 8192, 8192
          %178 = vsyncadd %s170, %s177
          %s179 = smul.addr %s174, 8
          %s180 = sadd.s32 %s175, %s179
          %s181 = smul.addr %s180, 128
          %s182 = scalar_lea.hbm %s0, %s181
          %s183 = sshll.u32 %s173, 4
          %s184 = int_to_ptr.vmem [resolvable:$true] %s183
          %189 = dma.hbm_to_vmem [thread:$0]  %s182, 8192, %s184, %s170, 1024, 512, 32
        $region20: #{layer_forward.1} parent=15 // pred_fallthru
          _
        // Predicated region
        $region21: #{layer_forward.1} parent=15 // pred_check
          %p190 = pneg %p87
        $region22: #{layer_forward.1} parent=15 // pred_check_branch
          %192 = sbr.rel (%p190) target = $region24
        $region23: #{layer_forward.1} parent=15 // pred_region
          %s193 = sand.u32 %s77, 1
          %s194 = scalar_lea.sflag [#allocation7], %s193
          %s195 = sand.u32 %s77, 1
          %s196 = smul.addr %s195, 1024
          %s197 = scalar_lea.vmem [#allocation6], %s196
          %s198 = smul.u32 64, %s27
          %s199 = smul.u32 2, %s26
          %s201 = ssub.s32 16384, 16384
          %202 = vsyncadd %s194, %s201
          %s203 = smul.addr %s198, 6
          %s204 = sadd.s32 %s199, %s203
          %s205 = smul.addr %s204, 128
          %s206 = scalar_lea.hbm %s1, %s205
          %s207 = sshll.u32 %s197, 4
          %s208 = int_to_ptr.vmem [resolvable:$true] %s207
          %213 = dma.hbm_to_vmem [thread:$0]  %s206, 16384, %s208, %s194, 768, 256, 16
        $region24: #{layer_forward.1} parent=15 // pred_fallthru
          _
        // Predicated region
        $region25: #{layer_forward.1} parent=15 // pred_check
          %p214 = pneg %p113
        $region26: #{layer_forward.1} parent=15 // pred_check_branch
          %216 = sbr.rel (%p214) target = $region28
        $region27: #{layer_forward.1} parent=15 // pred_region
          %s217 = smul.u32 2, %s26
          %p218 = scmp.lt.s32.totalorder %s217, 5
          %s219 = scalar_select %p218, %s217, 5
          %s220 = scalar_lea.vmem %s2, %s219
          %s221 = smul.u32 2, %s26
        $region28: #{layer_forward.1} parent=15 // pred_fallthru
          _
      $region16: #{layer_forward.1} parent=5 // pred_fallthru
        _
      %p222 = scmp.le.s32.totalorder 1, %s18
      %p223 = scmp.lt.s32.totalorder %s18, 19
      %p224 = pnand %p222, %p223
      %p225 = pneg %p224
      // Predicated region
      $region29: #{layer_forward.1} parent=5 // pred_check
        _
      $region30: #{layer_forward.1} parent=5 // pred_check_branch
        %227 = sbr.rel (%p224) target = $region32
      $region31: #{layer_forward.1} parent=5 // pred_region
        %s228 = ssub.s32 %s18, 1
        %s229 = sand.u32 %s52, 1
        %s230 = scalar_lea.sflag [#allocation4], %s229
        %s231 = sand.u32 %s52, 1
        %s232 = smul.addr %s231, 512
        %s233 = scalar_lea.vmem [#allocation3], %s232
        // Predicated region
        $region33: #{layer_forward.1} parent=31 // pred_check
          %p234 = pneg %p65
        $region34: #{layer_forward.1} parent=31 // pred_check_branch
          %236 = sbr.rel (%p234) target = $region36
        $region35: #{layer_forward.1} parent=31 // pred_region
          %237 = dma.done %s230, 8192
        $region36: #{layer_forward.1} parent=31 // pred_fallthru
          _
        %s238 = sand.u32 %s80, 1
        %s239 = scalar_lea.sflag [#allocation7], %s238
        %s240 = sand.u32 %s80, 1
        %s241 = smul.addr %s240, 1024
        %s242 = scalar_lea.vmem [#allocation6], %s241
        // Predicated region
        $region37: #{layer_forward.1} parent=31 // pred_check
          %p243 = pneg %p93
        $region38: #{layer_forward.1} parent=31 // pred_check_branch
          %245 = sbr.rel (%p243) target = $region40
        $region39: #{layer_forward.1} parent=31 // pred_region
          %246 = dma.done %s239, 16384
        $region40: #{layer_forward.1} parent=31 // pred_fallthru
          _
        %s247 = sand.u32 %s52, 1
        %s248 = scalar_lea.sflag [#allocation4], %s247
        %s249 = sand.u32 %s52, 1
        %s250 = smul.addr %s249, 512
        %s251 = scalar_lea.vmem [#allocation3], %s250
        %p252 = pneg %p65
        %p253 = pneg %p62
        %s254 = sand.u32 %s80, 1
        %s255 = scalar_lea.sflag [#allocation7], %s254
        %s256 = sand.u32 %s80, 1
        %s257 = smul.addr %s256, 1024
        %s258 = scalar_lea.vmem [#allocation6], %s257
        %p259 = pneg %p93
        %p260 = pneg %p90
        %s261 = smul.u32 2, %s29
        %p262 = scmp.lt.s32.totalorder %s261, 5
        %s263 = scalar_select %p262, %s261, 5
        %s264 = scalar_lea.vmem %s2, %s263
        %p265 = pneg %p119
        %p266 = pneg %p116
        %p267 = pneg %p147
        %p268 = pneg %p144
        %s269 = sand.u32 %s134, 1
        %s270 = scalar_lea.sflag [#allocation5], %s269
        %s271 = sand.u32 %s134, 1
        %s272 = smul.addr %s271, 256
        %s273 = scalar_lea.vmem [#allocation8], %s272
        %s274 = smul.u32 16, %s28
        %s275 = smul.u32 4, %s30
        %s276 = smul.u32 64, %s30
        %s277 = smul.u32 2, %s29
        %s278 = smul.u32 2, %s29
        %p279 = scmp.lt.s32.totalorder %s278, 5
        %s280 = scalar_select %p279, %s278, 5
        %s281 = scalar_lea.vmem %s2, %s280
        %s282 = smul.u32 2, %s29
        %s283 = smul.u32 16, %s28
        %s284 = smul.u32 2, %s29
        %p285 = scmp.eq.s32.totalorder %s30, 0
        // Predicated region
        $region41: #{layer_forward.1} parent=31 // pred_check
          %p286 = pneg %p285
        $region42: #{layer_forward.1} parent=31 // pred_check_branch
          %288 = sbr.rel (%p286) target = $region44
        $region43: #{layer_forward.1} parent=31 // pred_region
          %289 = vst [vmem:[#allocation2] sm:$0xff] 0.0
          %290 = vst [vmem:[#allocation2 + $0x8] sm:$0xff] 0.0
          %291 = vst [vmem:[#allocation2 + $0x10] sm:$0xff] 0.0
          %292 = vst [vmem:[#allocation2 + $0x18] sm:$0xff] 0.0
          %293 = vst [vmem:[#allocation2 + $0x20] sm:$0xff] 0.0
          %294 = vst [vmem:[#allocation2 + $0x28] sm:$0xff] 0.0
          %295 = vst [vmem:[#allocation2 + $0x30] sm:$0xff] 0.0
          %296 = vst [vmem:[#allocation2 + $0x38] sm:$0xff] 0.0
          %297 = vst [vmem:[#allocation2 + $0x40] sm:$0xff] 0.0
          %298 = vst [vmem:[#allocation2 + $0x48] sm:$0xff] 0.0
          %299 = vst [vmem:[#allocation2 + $0x50] sm:$0xff] 0.0
          %300 = vst [vmem:[#allocation2 + $0x58] sm:$0xff] 0.0
          %301 = vst [vmem:[#allocation2 + $0x60] sm:$0xff] 0.0
          %302 = vst [vmem:[#allocation2 + $0x68] sm:$0xff] 0.0
          %303 = vst [vmem:[#allocation2 + $0x70] sm:$0xff] 0.0
          %304 = vst [vmem:[#allocation2 + $0x78] sm:$0xff] 0.0
          %305 = vst [vmem:[#allocation2 + $0x80] sm:$0xff] 0.0
          %306 = vst [vmem:[#allocation2 + $0x88] sm:$0xff] 0.0
          %307 = vst [vmem:[#allocation2 + $0x90] sm:$0xff] 0.0
          %308 = vst [vmem:[#allocation2 + $0x98] sm:$0xff] 0.0
          %309 = vst [vmem:[#allocation2 + $0xa0] sm:$0xff] 0.0
          %310 = vst [vmem:[#allocation2 + $0xa8] sm:$0xff] 0.0
          %311 = vst [vmem:[#allocation2 + $0xb0] sm:$0xff] 0.0
          %312 = vst [vmem:[#allocation2 + $0xb8] sm:$0xff] 0.0
          %313 = vst [vmem:[#allocation2 + $0xc0] sm:$0xff] 0.0
          %314 = vst [vmem:[#allocation2 + $0xc8] sm:$0xff] 0.0
          %315 = vst [vmem:[#allocation2 + $0xd0] sm:$0xff] 0.0
          %316 = vst [vmem:[#allocation2 + $0xd8] sm:$0xff] 0.0
          %317 = vst [vmem:[#allocation2 + $0xe0] sm:$0xff] 0.0
          %318 = vst [vmem:[#allocation2 + $0xe8] sm:$0xff] 0.0
          %319 = vst [vmem:[#allocation2 + $0xf0] sm:$0xff] 0.0
          %320 = vst [vmem:[#allocation2 + $0xf8] sm:$0xff] 0.0
        $region44: #{layer_forward.1} parent=31 // pred_fallthru
          _
        %v321 = vld [vmem:[#allocation2] sm:$0xff]
        %v322 = vld [vmem:[#allocation2 + $0x8] sm:$0xff]
        %v323 = vld [vmem:[#allocation2 + $0x10] sm:$0xff]
        %v324 = vld [vmem:[#allocation2 + $0x18] sm:$0xff]
        %v325 = vld [vmem:[#allocation2 + $0x20] sm:$0xff]
        %v326 = vld [vmem:[#allocation2 + $0x28] sm:$0xff]
        %v327 = vld [vmem:[#allocation2 + $0x30] sm:$0xff]
        %v328 = vld [vmem:[#allocation2 + $0x38] sm:$0xff]
        %v329 = vld [vmem:[#allocation2 + $0x40] sm:$0xff]
        %v330 = vld [vmem:[#allocation2 + $0x48] sm:$0xff]
        %v331 = vld [vmem:[#allocation2 + $0x50] sm:$0xff]
        %v332 = vld [vmem:[#allocation2 + $0x58] sm:$0xff]
        %v333 = vld [vmem:[#allocation2 + $0x60] sm:$0xff]
        %v334 = vld [vmem:[#allocation2 + $0x68] sm:$0xff]
        %v335 = vld [vmem:[#allocation2 + $0x70] sm:$0xff]
        %v336 = vld [vmem:[#allocation2 + $0x78] sm:$0xff]
        %v337 = vld [vmem:[#allocation2 + $0x80] sm:$0xff]
        %v338 = vld [vmem:[#allocation2 + $0x88] sm:$0xff]
        %v339 = vld [vmem:[#allocation2 + $0x90] sm:$0xff]
        %v340 = vld [vmem:[#allocation2 + $0x98] sm:$0xff]
        %v341 = vld [vmem:[#allocation2 + $0xa0] sm:$0xff]
        %v342 = vld [vmem:[#allocation2 + $0xa8] sm:$0xff]
        %v343 = vld [vmem:[#allocation2 + $0xb0] sm:$0xff]
        %v344 = vld [vmem:[#allocation2 + $0xb8] sm:$0xff]
        %v345 = vld [vmem:[#allocation2 + $0xc0] sm:$0xff]
        %v346 = vld [vmem:[#allocation2 + $0xc8] sm:$0xff]
        %v347 = vld [vmem:[#allocation2 + $0xd0] sm:$0xff]
        %v348 = vld [vmem:[#allocation2 + $0xd8] sm:$0xff]
        %v349 = vld [vmem:[#allocation2 + $0xe0] sm:$0xff]
        %v350 = vld [vmem:[#allocation2 + $0xe8] sm:$0xff]
        %v351 = vld [vmem:[#allocation2 + $0xf0] sm:$0xff]
        %v352 = vld [vmem:[#allocation2 + $0xf8] sm:$0xff]
        %v353 = vld [vmem:[%s233] sm:$0xff]
        %v354 = vld [vmem:[%s233 + $0x8] sm:$0xff]
        %v355 = vld [vmem:[%s233 + $0x10] sm:$0xff]
        %v356 = vld [vmem:[%s233 + $0x18] sm:$0xff]
        %v357 = vld [vmem:[%s233 + $0x20] sm:$0xff]
        %v358 = vld [vmem:[%s233 + $0x28] sm:$0xff]
        %v359 = vld [vmem:[%s233 + $0x30] sm:$0xff]
        %v360 = vld [vmem:[%s233 + $0x38] sm:$0xff]
        %v361 = vld [vmem:[%s233 + $0x40] sm:$0xff]
        %v362 = vld [vmem:[%s233 + $0x48] sm:$0xff]
        %v363 = vld [vmem:[%s233 + $0x50] sm:$0xff]
        %v364 = vld [vmem:[%s233 + $0x58] sm:$0xff]
        %v365 = vld [vmem:[%s233 + $0x60] sm:$0xff]
        %v366 = vld [vmem:[%s233 + $0x68] sm:$0xff]
        %v367 = vld [vmem:[%s233 + $0x70] sm:$0xff]
        %v368 = vld [vmem:[%s233 + $0x78] sm:$0xff]
        %v369 = vld [vmem:[%s233 + $0x80] sm:$0xff]
        %v370 = vld [vmem:[%s233 + $0x88] sm:$0xff]
        %v371 = vld [vmem:[%s233 + $0x90] sm:$0xff]
        %v372 = vld [vmem:[%s233 + $0x98] sm:$0xff]
        %v373 = vld [vmem:[%s233 + $0xa0] sm:$0xff]
        %v374 = vld [vmem:[%s233 + $0xa8] sm:$0xff]
        %v375 = vld [vmem:[%s233 + $0xb0] sm:$0xff]
        %v376 = vld [vmem:[%s233 + $0xb8] sm:$0xff]
        %v377 = vld [vmem:[%s233 + $0xc0] sm:$0xff]
        %v378 = vld [vmem:[%s233 + $0xc8] sm:$0xff]
        %v379 = vld [vmem:[%s233 + $0xd0] sm:$0xff]
        %v380 = vld [vmem:[%s233 + $0xd8] sm:$0xff]
        %v381 = vld [vmem:[%s233 + $0xe0] sm:$0xff]
        %v382 = vld [vmem:[%s233 + $0xe8] sm:$0xff]
        %v383 = vld [vmem:[%s233 + $0xf0] sm:$0xff]
        %v384 = vld [vmem:[%s233 + $0xf8] sm:$0xff]
        %v385 = vld [vmem:[%s233 + $0x100] sm:$0xff]
        %v386 = vld [vmem:[%s233 + $0x108] sm:$0xff]
        %v387 = vld [vmem:[%s233 + $0x110] sm:$0xff]
        %v388 = vld [vmem:[%s233 + $0x118] sm:$0xff]
        %v389 = vld [vmem:[%s233 + $0x120] sm:$0xff]
        %v390 = vld [vmem:[%s233 + $0x128] sm:$0xff]
        %v391 = vld [vmem:[%s233 + $0x130] sm:$0xff]
        %v392 = vld [vmem:[%s233 + $0x138] sm:$0xff]
        %v393 = vld [vmem:[%s233 + $0x140] sm:$0xff]
        %v394 = vld [vmem:[%s233 + $0x148] sm:$0xff]
        %v395 = vld [vmem:[%s233 + $0x150] sm:$0xff]
        %v396 = vld [vmem:[%s233 + $0x158] sm:$0xff]
        %v397 = vld [vmem:[%s233 + $0x160] sm:$0xff]
        %v398 = vld [vmem:[%s233 + $0x168] sm:$0xff]
        %v399 = vld [vmem:[%s233 + $0x170] sm:$0xff]
        %v400 = vld [vmem:[%s233 + $0x178] sm:$0xff]
        %v401 = vld [vmem:[%s233 + $0x180] sm:$0xff]
        %v402 = vld [vmem:[%s233 + $0x188] sm:$0xff]
        %v403 = vld [vmem:[%s233 + $0x190] sm:$0xff]
        %v404 = vld [vmem:[%s233 + $0x198] sm:$0xff]
        %v405 = vld [vmem:[%s233 + $0x1a0] sm:$0xff]
        %v406 = vld [vmem:[%s233 + $0x1a8] sm:$0xff]
        %v407 = vld [vmem:[%s233 + $0x1b0] sm:$0xff]
        %v408 = vld [vmem:[%s233 + $0x1b8] sm:$0xff]
        %v409 = vld [vmem:[%s233 + $0x1c0] sm:$0xff]
        %v410 = vld [vmem:[%s233 + $0x1c8] sm:$0xff]
        %v411 = vld [vmem:[%s233 + $0x1d0] sm:$0xff]
        %v412 = vld [vmem:[%s233 + $0x1d8] sm:$0xff]
        %v413 = vld [vmem:[%s233 + $0x1e0] sm:$0xff]
        %v414 = vld [vmem:[%s233 + $0x1e8] sm:$0xff]
        %v415 = vld [vmem:[%s233 + $0x1f0] sm:$0xff]
        %v416 = vld [vmem:[%s233 + $0x1f8] sm:$0xff]
        %v417 = vld [vmem:[%s242] sm:$0xff]
        %v418 = vld [vmem:[%s242 + $0x8] sm:$0xff]
        %v419 = vld [vmem:[%s242 + $0x10] sm:$0xff]
        %v420 = vld [vmem:[%s242 + $0x18] sm:$0xff]
        %v421 = vld [vmem:[%s242 + $0x20] sm:$0xff]
        %v422 = vld [vmem:[%s242 + $0x28] sm:$0xff]
        %v423 = vld [vmem:[%s242 + $0x30] sm:$0xff]
        %v424 = vld [vmem:[%s242 + $0x38] sm:$0xff]
        %v425 = vld [vmem:[%s242 + $0x40] sm:$0xff]
        %v426 = vld [vmem:[%s242 + $0x48] sm:$0xff]
        %v427 = vld [vmem:[%s242 + $0x50] sm:$0xff]
        %v428 = vld [vmem:[%s242 + $0x58] sm:$0xff]
        %v429 = vld [vmem:[%s242 + $0x60] sm:$0xff]
        %v430 = vld [vmem:[%s242 + $0x68] sm:$0xff]
        %v431 = vld [vmem:[%s242 + $0x70] sm:$0xff]
        %v432 = vld [vmem:[%s242 + $0x78] sm:$0xff]
        %v433 = vld [vmem:[%s242 + $0x80] sm:$0xff]
        %v434 = vld [vmem:[%s242 + $0x88] sm:$0xff]
        %v435 = vld [vmem:[%s242 + $0x90] sm:$0xff]
        %v436 = vld [vmem:[%s242 + $0x98] sm:$0xff]
        %v437 = vld [vmem:[%s242 + $0xa0] sm:$0xff]
        %v438 = vld [vmem:[%s242 + $0xa8] sm:$0xff]
        %v439 = vld [vmem:[%s242 + $0xb0] sm:$0xff]
        %v440 = vld [vmem:[%s242 + $0xb8] sm:$0xff]
        %v441 = vld [vmem:[%s242 + $0xc0] sm:$0xff]
        %v442 = vld [vmem:[%s242 + $0xc8] sm:$0xff]
        %v443 = vld [vmem:[%s242 + $0xd0] sm:$0xff]
        %v444 = vld [vmem:[%s242 + $0xd8] sm:$0xff]
        %v445 = vld [vmem:[%s242 + $0xe0] sm:$0xff]
        %v446 = vld [vmem:[%s242 + $0xe8] sm:$0xff]
        %v447 = vld [vmem:[%s242 + $0xf0] sm:$0xff]
        %v448 = vld [vmem:[%s242 + $0xf8] sm:$0xff]
        %v449 = vld [vmem:[%s242 + $0x100] sm:$0xff]
        %v450 = vld [vmem:[%s242 + $0x108] sm:$0xff]
        %v451 = vld [vmem:[%s242 + $0x110] sm:$0xff]
        %v452 = vld [vmem:[%s242 + $0x118] sm:$0xff]
        %v453 = vld [vmem:[%s242 + $0x120] sm:$0xff]
        %v454 = vld [vmem:[%s242 + $0x128] sm:$0xff]
        %v455 = vld [vmem:[%s242 + $0x130] sm:$0xff]
        %v456 = vld [vmem:[%s242 + $0x138] sm:$0xff]
        %v457 = vld [vmem:[%s242 + $0x140] sm:$0xff]
        %v458 = vld [vmem:[%s242 + $0x148] sm:$0xff]
        %v459 = vld [vmem:[%s242 + $0x150] sm:$0xff]
        %v460 = vld [vmem:[%s242 + $0x158] sm:$0xff]
        %v461 = vld [vmem:[%s242 + $0x160] sm:$0xff]
        %v462 = vld [vmem:[%s242 + $0x168] sm:$0xff]
        %v463 = vld [vmem:[%s242 + $0x170] sm:$0xff]
        %v464 = vld [vmem:[%s242 + $0x178] sm:$0xff]
        %v465 = vld [vmem:[%s242 + $0x180] sm:$0xff]
        %v466 = vld [vmem:[%s242 + $0x188] sm:$0xff]
        %v467 = vld [vmem:[%s242 + $0x190] sm:$0xff]
        %v468 = vld [vmem:[%s242 + $0x198] sm:$0xff]
        %v469 = vld [vmem:[%s242 + $0x1a0] sm:$0xff]
        %v470 = vld [vmem:[%s242 + $0x1a8] sm:$0xff]
        %v471 = vld [vmem:[%s242 + $0x1b0] sm:$0xff]
        %v472 = vld [vmem:[%s242 + $0x1b8] sm:$0xff]
        %v473 = vld [vmem:[%s242 + $0x1c0] sm:$0xff]
        %v474 = vld [vmem:[%s242 + $0x1c8] sm:$0xff]
        %v475 = vld [vmem:[%s242 + $0x1d0] sm:$0xff]
        %v476 = vld [vmem:[%s242 + $0x1d8] sm:$0xff]
        %v477 = vld [vmem:[%s242 + $0x1e0] sm:$0xff]
        %v478 = vld [vmem:[%s242 + $0x1e8] sm:$0xff]
        %v479 = vld [vmem:[%s242 + $0x1f0] sm:$0xff]
        %v480 = vld [vmem:[%s242 + $0x1f8] sm:$0xff]
        %v481 = vld [vmem:[%s242 + $0x200] sm:$0xff]
        %v482 = vld [vmem:[%s242 + $0x208] sm:$0xff]
        %v483 = vld [vmem:[%s242 + $0x210] sm:$0xff]
        %v484 = vld [vmem:[%s242 + $0x218] sm:$0xff]
        %v485 = vld [vmem:[%s242 + $0x220] sm:$0xff]
        %v486 = vld [vmem:[%s242 + $0x228] sm:$0xff]
        %v487 = vld [vmem:[%s242 + $0x230] sm:$0xff]
        %v488 = vld [vmem:[%s242 + $0x238] sm:$0xff]
        %v489 = vld [vmem:[%s242 + $0x240] sm:$0xff]
        %v490 = vld [vmem:[%s242 + $0x248] sm:$0xff]
        %v491 = vld [vmem:[%s242 + $0x250] sm:$0xff]
        %v492 = vld [vmem:[%s242 + $0x258] sm:$0xff]
        %v493 = vld [vmem:[%s242 + $0x260] sm:$0xff]
        %v494 = vld [vmem:[%s242 + $0x268] sm:$0xff]
        %v495 = vld [vmem:[%s242 + $0x270] sm:$0xff]
        %v496 = vld [vmem:[%s242 + $0x278] sm:$0xff]
        %v497 = vld [vmem:[%s242 + $0x280] sm:$0xff]
        %v498 = vld [vmem:[%s242 + $0x288] sm:$0xff]
        %v499 = vld [vmem:[%s242 + $0x290] sm:$0xff]
        %v500 = vld [vmem:[%s242 + $0x298] sm:$0xff]
        %v501 = vld [vmem:[%s242 + $0x2a0] sm:$0xff]
        %v502 = vld [vmem:[%s242 + $0x2a8] sm:$0xff]
        %v503 = vld [vmem:[%s242 + $0x2b0] sm:$0xff]
        %v504 = vld [vmem:[%s242 + $0x2b8] sm:$0xff]
        %v505 = vld [vmem:[%s242 + $0x2c0] sm:$0xff]
        %v506 = vld [vmem:[%s242 + $0x2c8] sm:$0xff]
        %v507 = vld [vmem:[%s242 + $0x2d0] sm:$0xff]
        %v508 = vld [vmem:[%s242 + $0x2d8] sm:$0xff]
        %v509 = vld [vmem:[%s242 + $0x2e0] sm:$0xff]
        %v510 = vld [vmem:[%s242 + $0x2e8] sm:$0xff]
        %v511 = vld [vmem:[%s242 + $0x2f0] sm:$0xff]
        %v512 = vld [vmem:[%s242 + $0x2f8] sm:$0xff]
        %v513 = vld [vmem:[%s242 + $0x300] sm:$0xff]
        %v514 = vld [vmem:[%s242 + $0x308] sm:$0xff]
        %v515 = vld [vmem:[%s242 + $0x310] sm:$0xff]
        %v516 = vld [vmem:[%s242 + $0x318] sm:$0xff]
        %v517 = vld [vmem:[%s242 + $0x320] sm:$0xff]
        %v518 = vld [vmem:[%s242 + $0x328] sm:$0xff]
        %v519 = vld [vmem:[%s242 + $0x330] sm:$0xff]
        %v520 = vld [vmem:[%s242 + $0x338] sm:$0xff]
        %v521 = vld [vmem:[%s242 + $0x340] sm:$0xff]
        %v522 = vld [vmem:[%s242 + $0x348] sm:$0xff]
        %v523 = vld [vmem:[%s242 + $0x350] sm:$0xff]
        %v524 = vld [vmem:[%s242 + $0x358] sm:$0xff]
        %v525 = vld [vmem:[%s242 + $0x360] sm:$0xff]
        %v526 = vld [vmem:[%s242 + $0x368] sm:$0xff]
        %v527 = vld [vmem:[%s242 + $0x370] sm:$0xff]
        %v528 = vld [vmem:[%s242 + $0x378] sm:$0xff]
        %v529 = vld [vmem:[%s242 + $0x380] sm:$0xff]
        %v530 = vld [vmem:[%s242 + $0x388] sm:$0xff]
        %v531 = vld [vmem:[%s242 + $0x390] sm:$0xff]
        %v532 = vld [vmem:[%s242 + $0x398] sm:$0xff]
        %v533 = vld [vmem:[%s242 + $0x3a0] sm:$0xff]
        %v534 = vld [vmem:[%s242 + $0x3a8] sm:$0xff]
        %v535 = vld [vmem:[%s242 + $0x3b0] sm:$0xff]
        %v536 = vld [vmem:[%s242 + $0x3b8] sm:$0xff]
        %v537 = vld [vmem:[%s242 + $0x3c0] sm:$0xff]
        %v538 = vld [vmem:[%s242 + $0x3c8] sm:$0xff]
        %v539 = vld [vmem:[%s242 + $0x3d0] sm:$0xff]
        %v540 = vld [vmem:[%s242 + $0x3d8] sm:$0xff]
        %v541 = vld [vmem:[%s242 + $0x3e0] sm:$0xff]
        %v542 = vld [vmem:[%s242 + $0x3e8] sm:$0xff]
        %v543 = vld [vmem:[%s242 + $0x3f0] sm:$0xff]
        %v544 = vld [vmem:[%s242 + $0x3f8] sm:$0xff]
        %545 = vmatprep.subr.mxu0 %v448
        %546 = vmatpush1.msra.mxu0 %v447
        %547 = vmatprep.subr.mxu0 %v446
        %548 = vmatpush1.msra.mxu0 %v445
        %549 = vmatprep.subr.mxu0 %v444
        %550 = vmatpush1.msra.mxu0 %v443
        %551 = vmatprep.subr.mxu0 %v442
        %552 = vmatpush1.msra.mxu0 %v441
        %553 = vmatprep.subr.mxu0 %v440
        %554 = vmatpush1.msra.mxu0 %v439
        %555 = vmatprep.subr.mxu0 %v438
        %556 = vmatpush1.msra.mxu0 %v437
        %557 = vmatprep.subr.mxu0 %v436
        %558 = vmatpush1.msra.mxu0 %v435
        %559 = vmatprep.subr.mxu0 %v434
        %560 = vmatpush1.msra.mxu0 %v433
        %561 = vmatprep.subr.mxu0 %v432
        %562 = vmatpush1.msra.mxu0 %v431
        %563 = vmatprep.subr.mxu0 %v430
        %564 = vmatpush1.msra.mxu0 %v429
        %565 = vmatprep.subr.mxu0 %v428
        %566 = vmatpush1.msra.mxu0 %v427
        %567 = vmatprep.subr.mxu0 %v426
        %568 = vmatpush1.msra.mxu0 %v425
        %569 = vmatprep.subr.mxu0 %v424
        %570 = vmatpush1.msra.mxu0 %v423
        %571 = vmatprep.subr.mxu0 %v422
        %572 = vmatpush1.msra.mxu0 %v421
        %573 = vmatprep.subr.mxu0 %v420
        %574 = vmatpush1.msra.mxu0 %v419
        %575 = vmatprep.subr.mxu0 %v418
        %576 = vmatpush1.msra.mxu0 %v417
        %577 = vmatprep.subr.mxu0 %v480
        %578 = vmatpush2.msra.mxu0 %v479
        %579 = vmatprep.subr.mxu0 %v478
        %580 = vmatpush2.msra.mxu0 %v477
        %581 = vmatprep.subr.mxu0 %v476
        %582 = vmatpush2.msra.mxu0 %v475
        %583 = vmatprep.subr.mxu0 %v474
        %584 = vmatpush2.msra.mxu0 %v473
        %585 = vmatprep.subr.mxu0 %v472
        %586 = vmatpush2.msra.mxu0 %v471
        %587 = vmatprep.subr.mxu0 %v470
        %588 = vmatpush2.msra.mxu0 %v469
        %589 = vmatprep.subr.mxu0 %v468
        %590 = vmatpush2.msra.mxu0 %v467
        %591 = vmatprep.subr.mxu0 %v466
        %592 = vmatpush2.msra.mxu0 %v465
        %593 = vmatprep.subr.mxu0 %v464
        %594 = vmatpush2.msra.mxu0 %v463
        %595 = vmatprep.subr.mxu0 %v462
        %596 = vmatpush2.msra.mxu0 %v461
        %597 = vmatprep.subr.mxu0 %v460
        %598 = vmatpush2.msra.mxu0 %v459
        %599 = vmatprep.subr.mxu0 %v458
        %600 = vmatpush2.msra.mxu0 %v457
        %601 = vmatprep.subr.mxu0 %v456
        %602 = vmatpush2.msra.mxu0 %v455
        %603 = vmatprep.subr.mxu0 %v454
        %604 = vmatpush2.msra.mxu0 %v453
        %605 = vmatprep.subr.mxu0 %v452
        %606 = vmatpush2.msra.mxu0 %v451
        %607 = vmatprep.subr.mxu0 %v450
        %608 = vmatpush2.msra.mxu0 %v449
        %609 = vmatprep.mubr.f32.mxu0 %v354
        %610 = vmatmul.mubr.f32.gmra.mxu0 %v353
        %v611 = vpop.f32.mrf.mxu0
        %v612 = vadd.f32 0.0, %v611
        %v613 = vpop.f32.mrf.mxu0
        %v614 = vadd.f32 0.0, %v613
        %615 = vmatprep.mubr.f32.mxu0 %v358
        %616 = vmatmul.mubr.f32.gmra.mxu0 %v357
        %v617 = vpop.f32.mrf.mxu0
        %v618 = vadd.f32 0.0, %v617
        %v619 = vpop.f32.mrf.mxu0
        %v620 = vadd.f32 0.0, %v619
        %621 = vmatprep.mubr.f32.mxu0 %v362
        %622 = vmatmul.mubr.f32.gmra.mxu0 %v361
        %v623 = vpop.f32.mrf.mxu0
        %v624 = vadd.f32 0.0, %v623
        %v625 = vpop.f32.mrf.mxu0
        %v626 = vadd.f32 0.0, %v625
        %627 = vmatprep.mubr.f32.mxu0 %v366
        %628 = vmatmul.mubr.f32.gmra.mxu0 %v365
        %v629 = vpop.f32.mrf.mxu0
        %v630 = vadd.f32 0.0, %v629
        %v631 = vpop.f32.mrf.mxu0
        %v632 = vadd.f32 0.0, %v631
        %633 = vmatprep.mubr.f32.mxu0 %v370
        %634 = vmatmul.mubr.f32.gmra.mxu0 %v369
        %v635 = vpop.f32.mrf.mxu0
        %v636 = vadd.f32 0.0, %v635
        %v637 = vpop.f32.mrf.mxu0
        %v638 = vadd.f32 0.0, %v637
        %639 = vmatprep.mubr.f32.mxu0 %v374
        %640 = vmatmul.mubr.f32.gmra.mxu0 %v373
        %v641 = vpop.f32.mrf.mxu0
        %v642 = vadd.f32 0.0, %v641
        %v643 = vpop.f32.mrf.mxu0
        %v644 = vadd.f32 0.0, %v643
        %645 = vmatprep.mubr.f32.mxu0 %v378
        %646 = vmatmul.mubr.f32.gmra.mxu0 %v377
        %v647 = vpop.f32.mrf.mxu0
        %v648 = vadd.f32 0.0, %v647
        %v649 = vpop.f32.mrf.mxu0
        %v650 = vadd.f32 0.0, %v649
        %651 = vmatprep.mubr.f32.mxu0 %v382
        %652 = vmatmul.mubr.f32.gmra.mxu0 %v381
        %v653 = vpop.f32.mrf.mxu0
        %v654 = vadd.f32 0.0, %v653
        %v655 = vpop.f32.mrf.mxu0
        %v656 = vadd.f32 0.0, %v655
        %657 = vmatprep.mubr.f32.mxu0 %v386
        %658 = vmatmul.mubr.f32.gmra.mxu0 %v385
        %v659 = vpop.f32.mrf.mxu0
        %v660 = vadd.f32 0.0, %v659
        %v661 = vpop.f32.mrf.mxu0
        %v662 = vadd.f32 0.0, %v661
        %663 = vmatprep.mubr.f32.mxu0 %v390
        %664 = vmatmul.mubr.f32.gmra.mxu0 %v389
        %v665 = vpop.f32.mrf.mxu0
        %v666 = vadd.f32 0.0, %v665
        %v667 = vpop.f32.mrf.mxu0
        %v668 = vadd.f32 0.0, %v667
        %669 = vmatprep.mubr.f32.mxu0 %v394
        %670 = vmatmul.mubr.f32.gmra.mxu0 %v393
        %v671 = vpop.f32.mrf.mxu0
        %v672 = vadd.f32 0.0, %v671
        %v673 = vpop.f32.mrf.mxu0
        %v674 = vadd.f32 0.0, %v673
        %675 = vmatprep.mubr.f32.mxu0 %v398
        %676 = vmatmul.mubr.f32.gmra.mxu0 %v397
        %v677 = vpop.f32.mrf.mxu0
        %v678 = vadd.f32 0.0, %v677
        %v679 = vpop.f32.mrf.mxu0
        %v680 = vadd.f32 0.0, %v679
        %681 = vmatprep.mubr.f32.mxu0 %v402
        %682 = vmatmul.mubr.f32.gmra.mxu0 %v401
        %v683 = vpop.f32.mrf.mxu0
        %v684 = vadd.f32 0.0, %v683
        %v685 = vpop.f32.mrf.mxu0
        %v686 = vadd.f32 0.0, %v685
        %687 = vmatprep.mubr.f32.mxu0 %v406
        %688 = vmatmul.mubr.f32.gmra.mxu0 %v405
        %v689 = vpop.f32.mrf.mxu0
        %v690 = vadd.f32 0.0, %v689
        %v691 = vpop.f32.mrf.mxu0
        %v692 = vadd.f32 0.0, %v691
        %693 = vmatprep.mubr.f32.mxu0 %v410
        %694 = vmatmul.mubr.f32.gmra.mxu0 %v409
        %v695 = vpop.f32.mrf.mxu0
        %v696 = vadd.f32 0.0, %v695
        %v697 = vpop.f32.mrf.mxu0
        %v698 = vadd.f32 0.0, %v697
        %699 = vmatprep.mubr.f32.mxu0 %v414
        %700 = vmatmul.mubr.f32.gmra.mxu0 %v413
        %v701 = vpop.f32.mrf.mxu0
        %v702 = vadd.f32 0.0, %v701
        %v703 = vpop.f32.mrf.mxu0
        %v704 = vadd.f32 0.0, %v703
        %705 = vdwg.mxu0
        %706 = vmatprep.subr.mxu0 %v512
        %707 = vmatpush1.msra.mxu0 %v511
        %708 = vmatprep.subr.mxu0 %v510
        %709 = vmatpush1.msra.mxu0 %v509
        %710 = vmatprep.subr.mxu0 %v508
        %711 = vmatpush1.msra.mxu0 %v507
        %712 = vmatprep.subr.mxu0 %v506
        %713 = vmatpush1.msra.mxu0 %v505
        %714 = vmatprep.subr.mxu0 %v504
        %715 = vmatpush1.msra.mxu0 %v503
        %716 = vmatprep.subr.mxu0 %v502
        %717 = vmatpush1.msra.mxu0 %v501
        %718 = vmatprep.subr.mxu0 %v500
        %719 = vmatpush1.msra.mxu0 %v499
        %720 = vmatprep.subr.mxu0 %v498
        %721 = vmatpush1.msra.mxu0 %v497
        %722 = vmatprep.subr.mxu0 %v496
        %723 = vmatpush1.msra.mxu0 %v495
        %724 = vmatprep.subr.mxu0 %v494
        %725 = vmatpush1.msra.mxu0 %v493
        %726 = vmatprep.subr.mxu0 %v492
        %727 = vmatpush1.msra.mxu0 %v491
        %728 = vmatprep.subr.mxu0 %v490
        %729 = vmatpush1.msra.mxu0 %v489
        %730 = vmatprep.subr.mxu0 %v488
        %731 = vmatpush1.msra.mxu0 %v487
        %732 = vmatprep.subr.mxu0 %v486
        %733 = vmatpush1.msra.mxu0 %v485
        %734 = vmatprep.subr.mxu0 %v484
        %735 = vmatpush1.msra.mxu0 %v483
        %736 = vmatprep.subr.mxu0 %v482
        %737 = vmatpush1.msra.mxu0 %v481
        %738 = vmatprep.subr.mxu0 %v544
        %739 = vmatpush2.msra.mxu0 %v543
        %740 = vmatprep.subr.mxu0 %v542
        %741 = vmatpush2.msra.mxu0 %v541
        %742 = vmatprep.subr.mxu0 %v540
        %743 = vmatpush2.msra.mxu0 %v539
        %744 = vmatprep.subr.mxu0 %v538
        %745 = vmatpush2.msra.mxu0 %v537
        %746 = vmatprep.subr.mxu0 %v536
        %747 = vmatpush2.msra.mxu0 %v535
        %748 = vmatprep.subr.mxu0 %v534
        %749 = vmatpush2.msra.mxu0 %v533
        %750 = vmatprep.subr.mxu0 %v532
        %751 = vmatpush2.msra.mxu0 %v531
        %752 = vmatprep.subr.mxu0 %v530
        %753 = vmatpush2.msra.mxu0 %v529
        %754 = vmatprep.subr.mxu0 %v528
        %755 = vmatpush2.msra.mxu0 %v527
        %756 = vmatprep.subr.mxu0 %v526
        %757 = vmatpush2.msra.mxu0 %v525
        %758 = vmatprep.subr.mxu0 %v524
        %759 = vmatpush2.msra.mxu0 %v523
        %760 = vmatprep.subr.mxu0 %v522
        %761 = vmatpush2.msra.mxu0 %v521
        %762 = vmatprep.subr.mxu0 %v520
        %763 = vmatpush2.msra.mxu0 %v519
        %764 = vmatprep.subr.mxu0 %v518
        %765 = vmatpush2.msra.mxu0 %v517
        %766 = vmatprep.subr.mxu0 %v516
        %767 = vmatpush2.msra.mxu0 %v515
        %768 = vmatprep.subr.mxu0 %v514
        %769 = vmatpush2.msra.mxu0 %v513
        %770 = vmatprep.mubr.f32.mxu0 %v356
        %771 = vmatmul.mubr.f32.gmra.mxu0 %v355
        %v772 = vpop.f32.mrf.mxu0
        %v773 = vadd.f32 %v612, %v772
        %v774 = vpop.f32.mrf.mxu0
        %v775 = vadd.f32 %v614, %v774
        %776 = vmatprep.mubr.f32.mxu0 %v360
        %777 = vmatmul.mubr.f32.gmra.mxu0 %v359
        %v778 = vpop.f32.mrf.mxu0
        %v779 = vadd.f32 %v618, %v778
        %v780 = vpop.f32.mrf.mxu0
        %v781 = vadd.f32 %v620, %v780
        %782 = vmatprep.mubr.f32.mxu0 %v364
        %783 = vmatmul.mubr.f32.gmra.mxu0 %v363
        %v784 = vpop.f32.mrf.mxu0
        %v785 = vadd.f32 %v624, %v784
        %v786 = vpop.f32.mrf.mxu0
        %v787 = vadd.f32 %v626, %v786
        %788 = vmatprep.mubr.f32.mxu0 %v368
        %789 = vmatmul.mubr.f32.gmra.mxu0 %v367
        %v790 = vpop.f32.mrf.mxu0
        %v791 = vadd.f32 %v630, %v790
        %v792 = vpop.f32.mrf.mxu0
        %v793 = vadd.f32 %v632, %v792
        %794 = vmatprep.mubr.f32.mxu0 %v372
        %795 = vmatmul.mubr.f32.gmra.mxu0 %v371
        %v796 = vpop.f32.mrf.mxu0
        %v797 = vadd.f32 %v636, %v796
        %v798 = vpop.f32.mrf.mxu0
        %v799 = vadd.f32 %v638, %v798
        %800 = vmatprep.mubr.f32.mxu0 %v376
        %801 = vmatmul.mubr.f32.gmra.mxu0 %v375
        %v802 = vpop.f32.mrf.mxu0
        %v803 = vadd.f32 %v642, %v802
        %v804 = vpop.f32.mrf.mxu0
        %v805 = vadd.f32 %v644, %v804
        %806 = vmatprep.mubr.f32.mxu0 %v380
        %807 = vmatmul.mubr.f32.gmra.mxu0 %v379
        %v808 = vpop.f32.mrf.mxu0
        %v809 = vadd.f32 %v648, %v808
        %v810 = vpop.f32.mrf.mxu0
        %v811 = vadd.f32 %v650, %v810
        %812 = vmatprep.mubr.f32.mxu0 %v384
        %813 = vmatmul.mubr.f32.gmra.mxu0 %v383
        %v814 = vpop.f32.mrf.mxu0
        %v815 = vadd.f32 %v654, %v814
        %v816 = vpop.f32.mrf.mxu0
        %v817 = vadd.f32 %v656, %v816
        %818 = vmatprep.mubr.f32.mxu0 %v388
        %819 = vmatmul.mubr.f32.gmra.mxu0 %v387
        %v820 = vpop.f32.mrf.mxu0
        %v821 = vadd.f32 %v660, %v820
        %v822 = vpop.f32.mrf.mxu0
        %v823 = vadd.f32 %v662, %v822
        %824 = vmatprep.mubr.f32.mxu0 %v392
        %825 = vmatmul.mubr.f32.gmra.mxu0 %v391
        %v826 = vpop.f32.mrf.mxu0
        %v827 = vadd.f32 %v666, %v826
        %v828 = vpop.f32.mrf.mxu0
        %v829 = vadd.f32 %v668, %v828
        %830 = vmatprep.mubr.f32.mxu0 %v396
        %831 = vmatmul.mubr.f32.gmra.mxu0 %v395
        %v832 = vpop.f32.mrf.mxu0
        %v833 = vadd.f32 %v672, %v832
        %v834 = vpop.f32.mrf.mxu0
        %v835 = vadd.f32 %v674, %v834
        %836 = vmatprep.mubr.f32.mxu0 %v400
        %837 = vmatmul.mubr.f32.gmra.mxu0 %v399
        %v838 = vpop.f32.mrf.mxu0
        %v839 = vadd.f32 %v678, %v838
        %v840 = vpop.f32.mrf.mxu0
        %v841 = vadd.f32 %v680, %v840
        %842 = vmatprep.mubr.f32.mxu0 %v404
        %843 = vmatmul.mubr.f32.gmra.mxu0 %v403
        %v844 = vpop.f32.mrf.mxu0
        %v845 = vadd.f32 %v684, %v844
        %v846 = vpop.f32.mrf.mxu0
        %v847 = vadd.f32 %v686, %v846
        %848 = vmatprep.mubr.f32.mxu0 %v408
        %849 = vmatmul.mubr.f32.gmra.mxu0 %v407
        %v850 = vpop.f32.mrf.mxu0
        %v851 = vadd.f32 %v690, %v850
        %v852 = vpop.f32.mrf.mxu0
        %v853 = vadd.f32 %v692, %v852
        %854 = vmatprep.mubr.f32.mxu0 %v412
        %855 = vmatmul.mubr.f32.gmra.mxu0 %v411
        %v856 = vpop.f32.mrf.mxu0
        %v857 = vadd.f32 %v696, %v856
        %v858 = vpop.f32.mrf.mxu0
        %v859 = vadd.f32 %v698, %v858
        %860 = vmatprep.mubr.f32.mxu0 %v416
        %861 = vmatmul.mubr.f32.gmra.mxu0 %v415
        %v862 = vpop.f32.mrf.mxu0
        %v863 = vadd.f32 %v702, %v862
        %v864 = vpop.f32.mrf.mxu0
        %v865 = vadd.f32 %v704, %v864
        %866 = vdwg.mxu0
        %v867 = vadd.f32 %v321, %v773
        %v868 = vadd.f32 %v322, %v775
        %v869 = vadd.f32 %v323, %v779
        %v870 = vadd.f32 %v324, %v781
        %v871 = vadd.f32 %v325, %v785
        %v872 = vadd.f32 %v326, %v787
        %v873 = vadd.f32 %v327, %v791
        %v874 = vadd.f32 %v328, %v793
        %v875 = vadd.f32 %v329, %v797
        %v876 = vadd.f32 %v330, %v799
        %v877 = vadd.f32 %v331, %v803
        %v878 = vadd.f32 %v332, %v805
        %v879 = vadd.f32 %v333, %v809
        %v880 = vadd.f32 %v334, %v811
        %v881 = vadd.f32 %v335, %v815
        %v882 = vadd.f32 %v336, %v817
        %v883 = vadd.f32 %v337, %v821
        %v884 = vadd.f32 %v338, %v823
        %v885 = vadd.f32 %v339, %v827
        %v886 = vadd.f32 %v340, %v829
        %v887 = vadd.f32 %v341, %v833
        %v888 = vadd.f32 %v342, %v835
        %v889 = vadd.f32 %v343, %v839
        %v890 = vadd.f32 %v344, %v841
        %v891 = vadd.f32 %v345, %v845
        %v892 = vadd.f32 %v346, %v847
        %v893 = vadd.f32 %v347, %v851
        %v894 = vadd.f32 %v348, %v853
        %v895 = vadd.f32 %v349, %v857
        %v896 = vadd.f32 %v350, %v859
        %v897 = vadd.f32 %v351, %v863
        %v898 = vadd.f32 %v352, %v865
        %899 = vst [vmem:[#allocation2] sm:$0xff] %v867
        %900 = vst [vmem:[#allocation2 + $0x8] sm:$0xff] %v868
        %901 = vst [vmem:[#allocation2 + $0x10] sm:$0xff] %v869
        %902 = vst [vmem:[#allocation2 + $0x18] sm:$0xff] %v870
        %903 = vst [vmem:[#allocation2 + $0x20] sm:$0xff] %v871
        %904 = vst [vmem:[#allocation2 + $0x28] sm:$0xff] %v872
        %905 = vst [vmem:[#allocation2 + $0x30] sm:$0xff] %v873
        %906 = vst [vmem:[#allocation2 + $0x38] sm:$0xff] %v874
        %907 = vst [vmem:[#allocation2 + $0x40] sm:$0xff] %v875
        %908 = vst [vmem:[#allocation2 + $0x48] sm:$0xff] %v876
        %909 = vst [vmem:[#allocation2 + $0x50] sm:$0xff] %v877
        %910 = vst [vmem:[#allocation2 + $0x58] sm:$0xff] %v878
        %911 = vst [vmem:[#allocation2 + $0x60] sm:$0xff] %v879
        %912 = vst [vmem:[#allocation2 + $0x68] sm:$0xff] %v880
        %913 = vst [vmem:[#allocation2 + $0x70] sm:$0xff] %v881
        %914 = vst [vmem:[#allocation2 + $0x78] sm:$0xff] %v882
        %915 = vst [vmem:[#allocation2 + $0x80] sm:$0xff] %v883
        %916 = vst [vmem:[#allocation2 + $0x88] sm:$0xff] %v884
        %917 = vst [vmem:[#allocation2 + $0x90] sm:$0xff] %v885
        %918 = vst [vmem:[#allocation2 + $0x98] sm:$0xff] %v886
        %919 = vst [vmem:[#allocation2 + $0xa0] sm:$0xff] %v887
        %920 = vst [vmem:[#allocation2 + $0xa8] sm:$0xff] %v888
        %921 = vst [vmem:[#allocation2 + $0xb0] sm:$0xff] %v889
        %922 = vst [vmem:[#allocation2 + $0xb8] sm:$0xff] %v890
        %923 = vst [vmem:[#allocation2 + $0xc0] sm:$0xff] %v891
        %924 = vst [vmem:[#allocation2 + $0xc8] sm:$0xff] %v892
        %925 = vst [vmem:[#allocation2 + $0xd0] sm:$0xff] %v893
        %926 = vst [vmem:[#allocation2 + $0xd8] sm:$0xff] %v894
        %927 = vst [vmem:[#allocation2 + $0xe0] sm:$0xff] %v895
        %928 = vst [vmem:[#allocation2 + $0xe8] sm:$0xff] %v896
        %929 = vst [vmem:[#allocation2 + $0xf0] sm:$0xff] %v897
        %930 = vst [vmem:[#allocation2 + $0xf8] sm:$0xff] %v898
        %p931 = scmp.eq.s32.totalorder %s30, 1
        // Predicated region
        $region45: #{layer_forward.1} parent=31 // pred_check
          %p932 = pneg %p931
        $region46: #{layer_forward.1} parent=31 // pred_check_branch
          %934 = sbr.rel (%p932) target = $region48
        $region47: #{layer_forward.1} parent=31 // pred_region
          %v935 = vld [vmem:[#allocation2] sm:$0xff]
          %v936 = vld [vmem:[#allocation2 + $0x8] sm:$0xff]
          %v937 = vld [vmem:[#allocation2 + $0x10] sm:$0xff]
          %v938 = vld [vmem:[#allocation2 + $0x18] sm:$0xff]
          %v939 = vld [vmem:[#allocation2 + $0x20] sm:$0xff]
          %v940 = vld [vmem:[#allocation2 + $0x28] sm:$0xff]
          %v941 = vld [vmem:[#allocation2 + $0x30] sm:$0xff]
          %v942 = vld [vmem:[#allocation2 + $0x38] sm:$0xff]
          %v943 = vld [vmem:[#allocation2 + $0x40] sm:$0xff]
          %v944 = vld [vmem:[#allocation2 + $0x48] sm:$0xff]
          %v945 = vld [vmem:[#allocation2 + $0x50] sm:$0xff]
          %v946 = vld [vmem:[#allocation2 + $0x58] sm:$0xff]
          %v947 = vld [vmem:[#allocation2 + $0x60] sm:$0xff]
          %v948 = vld [vmem:[#allocation2 + $0x68] sm:$0xff]
          %v949 = vld [vmem:[#allocation2 + $0x70] sm:$0xff]
          %v950 = vld [vmem:[#allocation2 + $0x78] sm:$0xff]
          %v951 = vld [vmem:[#allocation2 + $0x80] sm:$0xff]
          %v952 = vld [vmem:[#allocation2 + $0x88] sm:$0xff]
          %v953 = vld [vmem:[#allocation2 + $0x90] sm:$0xff]
          %v954 = vld [vmem:[#allocation2 + $0x98] sm:$0xff]
          %v955 = vld [vmem:[#allocation2 + $0xa0] sm:$0xff]
          %v956 = vld [vmem:[#allocation2 + $0xa8] sm:$0xff]
          %v957 = vld [vmem:[#allocation2 + $0xb0] sm:$0xff]
          %v958 = vld [vmem:[#allocation2 + $0xb8] sm:$0xff]
          %v959 = vld [vmem:[#allocation2 + $0xc0] sm:$0xff]
          %v960 = vld [vmem:[#allocation2 + $0xc8] sm:$0xff]
          %v961 = vld [vmem:[#allocation2 + $0xd0] sm:$0xff]
          %v962 = vld [vmem:[#allocation2 + $0xd8] sm:$0xff]
          %v963 = vld [vmem:[#allocation2 + $0xe0] sm:$0xff]
          %v964 = vld [vmem:[#allocation2 + $0xe8] sm:$0xff]
          %v965 = vld [vmem:[#allocation2 + $0xf0] sm:$0xff]
          %v966 = vld [vmem:[#allocation2 + $0xf8] sm:$0xff]
          %v967 = vld [vmem:[%s281] sm:$0x3]
          %v969 = vlaneseq
          %v970 = vshrl.u32 %v969, 7
          %v971 = vsub.s32 0, %v970
          %v972 = vrot.slane %v967, %v971
          %v973 = vlaneseq
          %v974 = vshrl.u32 %v973, 7
          %v975 = vsub.s32 1, %v974
          %v976 = vrot.slane %v967, %v975
          %v979 = vadd.f32 %v935, %v972
          %v980 = vadd.f32 %v936, %v976
          %v981 = vadd.f32 %v937, %v972
          %v982 = vadd.f32 %v938, %v976
          %v983 = vadd.f32 %v939, %v972
          %v984 = vadd.f32 %v940, %v976
          %v985 = vadd.f32 %v941, %v972
          %v986 = vadd.f32 %v942, %v976
          %v987 = vadd.f32 %v943, %v972
          %v988 = vadd.f32 %v944, %v976
          %v989 = vadd.f32 %v945, %v972
          %v990 = vadd.f32 %v946, %v976
          %v991 = vadd.f32 %v947, %v972
          %v992 = vadd.f32 %v948, %v976
          %v993 = vadd.f32 %v949, %v972
          %v994 = vadd.f32 %v950, %v976
          %v995 = vadd.f32 %v951, %v972
          %v996 = vadd.f32 %v952, %v976
          %v997 = vadd.f32 %v953, %v972
          %v998 = vadd.f32 %v954, %v976
          %v999 = vadd.f32 %v955, %v972
          %v1000 = vadd.f32 %v956, %v976
          %v1001 = vadd.f32 %v957, %v972
          %v1002 = vadd.f32 %v958, %v976
          %v1003 = vadd.f32 %v959, %v972
          %v1004 = vadd.f32 %v960, %v976
          %v1005 = vadd.f32 %v961, %v972
          %v1006 = vadd.f32 %v962, %v976
          %v1007 = vadd.f32 %v963, %v972
          %v1008 = vadd.f32 %v964, %v976
          %v1009 = vadd.f32 %v965, %v972
          %v1010 = vadd.f32 %v966, %v976
          %v1011 = vmax.f32 %v979, 0.0
          %v1012 = vmax.f32 %v980, 0.0
          %v1013 = vmax.f32 %v981, 0.0
          %v1014 = vmax.f32 %v982, 0.0
          %v1015 = vmax.f32 %v983, 0.0
          %v1016 = vmax.f32 %v984, 0.0
          %v1017 = vmax.f32 %v985, 0.0
          %v1018 = vmax.f32 %v986, 0.0
          %v1019 = vmax.f32 %v987, 0.0
          %v1020 = vmax.f32 %v988, 0.0
          %v1021 = vmax.f32 %v989, 0.0
          %v1022 = vmax.f32 %v990, 0.0
          %v1023 = vmax.f32 %v991, 0.0
          %v1024 = vmax.f32 %v992, 0.0
          %v1025 = vmax.f32 %v993, 0.0
          %v1026 = vmax.f32 %v994, 0.0
          %v1027 = vmax.f32 %v995, 0.0
          %v1028 = vmax.f32 %v996, 0.0
          %v1029 = vmax.f32 %v997, 0.0
          %v1030 = vmax.f32 %v998, 0.0
          %v1031 = vmax.f32 %v999, 0.0
          %v1032 = vmax.f32 %v1000, 0.0
          %v1033 = vmax.f32 %v1001, 0.0
          %v1034 = vmax.f32 %v1002, 0.0
          %v1035 = vmax.f32 %v1003, 0.0
          %v1036 = vmax.f32 %v1004, 0.0
          %v1037 = vmax.f32 %v1005, 0.0
          %v1038 = vmax.f32 %v1006, 0.0
          %v1039 = vmax.f32 %v1007, 0.0
          %v1040 = vmax.f32 %v1008, 0.0
          %v1041 = vmax.f32 %v1009, 0.0
          %v1042 = vmax.f32 %v1010, 0.0
          %1043 = vst [vmem:[%s273] sm:$0xff] %v1011
          %1044 = vst [vmem:[%s273 + $0x8] sm:$0xff] %v1012
          %1045 = vst [vmem:[%s273 + $0x10] sm:$0xff] %v1013
          %1046 = vst [vmem:[%s273 + $0x18] sm:$0xff] %v1014
          %1047 = vst [vmem:[%s273 + $0x20] sm:$0xff] %v1015
          %1048 = vst [vmem:[%s273 + $0x28] sm:$0xff] %v1016
          %1049 = vst [vmem:[%s273 + $0x30] sm:$0xff] %v1017
          %1050 = vst [vmem:[%s273 + $0x38] sm:$0xff] %v1018
          %1051 = vst [vmem:[%s273 + $0x40] sm:$0xff] %v1019
          %1052 = vst [vmem:[%s273 + $0x48] sm:$0xff] %v1020
          %1053 = vst [vmem:[%s273 + $0x50] sm:$0xff] %v1021
          %1054 = vst [vmem:[%s273 + $0x58] sm:$0xff] %v1022
          %1055 = vst [vmem:[%s273 + $0x60] sm:$0xff] %v1023
          %1056 = vst [vmem:[%s273 + $0x68] sm:$0xff] %v1024
          %1057 = vst [vmem:[%s273 + $0x70] sm:$0xff] %v1025
          %1058 = vst [vmem:[%s273 + $0x78] sm:$0xff] %v1026
          %1059 = vst [vmem:[%s273 + $0x80] sm:$0xff] %v1027
          %1060 = vst [vmem:[%s273 + $0x88] sm:$0xff] %v1028
          %1061 = vst [vmem:[%s273 + $0x90] sm:$0xff] %v1029
          %1062 = vst [vmem:[%s273 + $0x98] sm:$0xff] %v1030
          %1063 = vst [vmem:[%s273 + $0xa0] sm:$0xff] %v1031
          %1064 = vst [vmem:[%s273 + $0xa8] sm:$0xff] %v1032
          %1065 = vst [vmem:[%s273 + $0xb0] sm:$0xff] %v1033
          %1066 = vst [vmem:[%s273 + $0xb8] sm:$0xff] %v1034
          %1067 = vst [vmem:[%s273 + $0xc0] sm:$0xff] %v1035
          %1068 = vst [vmem:[%s273 + $0xc8] sm:$0xff] %v1036
          %1069 = vst [vmem:[%s273 + $0xd0] sm:$0xff] %v1037
          %1070 = vst [vmem:[%s273 + $0xd8] sm:$0xff] %v1038
          %1071 = vst [vmem:[%s273 + $0xe0] sm:$0xff] %v1039
          %1072 = vst [vmem:[%s273 + $0xe8] sm:$0xff] %v1040
          %1073 = vst [vmem:[%s273 + $0xf0] sm:$0xff] %v1041
          %1074 = vst [vmem:[%s273 + $0xf8] sm:$0xff] %v1042
        $region48: #{layer_forward.1} parent=31 // pred_fallthru
          _
        %s1075 = sand.u32 %s134, 1
        %s1076 = scalar_lea.sflag [#allocation5], %s1075
        %s1077 = sand.u32 %s134, 1
        %s1078 = smul.addr %s1077, 256
        %s1079 = scalar_lea.vmem [#allocation8], %s1078
        // Predicated region
        $region49: #{layer_forward.1} parent=31 // pred_check
          %p1080 = pneg %p144
        $region50: #{layer_forward.1} parent=31 // pred_check_branch
          %1082 = sbr.rel (%p1080) target = $region52
        $region51: #{layer_forward.1} parent=31 // pred_region
          %s1083 = smul.u32 16, %s28
          %s1084 = smul.u32 2, %s29
          %s1086 = ssub.s32 4096, 4096
          %1087 = vsyncadd %s1076, %s1086
          %s1088 = smul.addr %s1083, 6
          %s1089 = sadd.s32 %s1084, %s1088
          %s1090 = smul.addr %s1089, 128
          %s1091 = scalar_lea.hbm %s3, %s1090
          %s1092 = sshll.u32 %s1079, 4
          %s1093 = int_to_ptr.vmem [resolvable:$true] %s1092
          %1098 = dma.vmem_to_hbm [thread:$0]  %s1093, 4096, %s1091, %s1076, 256, 768, 16
        $region52: #{layer_forward.1} parent=31 // pred_fallthru
          _
      $region32: #{layer_forward.1} parent=5 // pred_fallthru
        _
      %p1099 = scmp.le.s32.totalorder 2, %s18
      // Predicated region
      $region53: #{layer_forward.1} parent=5 // pred_check
        %p1100 = pneg %p1099
      $region54: #{layer_forward.1} parent=5 // pred_check_branch
        %1102 = sbr.rel (%p1100) target = $region56
      $region55: #{layer_forward.1} parent=5 // pred_region
        %s1103 = ssub.s32 %s18, 2
        // Predicated region
        $region57: #{layer_forward.1} parent=55 // pred_check
          %p1104 = pneg %p150
        $region58: #{layer_forward.1} parent=55 // pred_check_branch
          %1106 = sbr.rel (%p1104) target = $region60
        $region59: #{layer_forward.1} parent=55 // pred_region
          %s1107 = sand.u32 %s135, 1
          %s1108 = scalar_lea.sflag [#allocation5], %s1107
          %s1109 = sand.u32 %s135, 1
          %s1110 = smul.addr %s1109, 256
          %s1111 = scalar_lea.vmem [#allocation8], %s1110
          %1112 = dma.done %s1108, 4096
        $region60: #{layer_forward.1} parent=55 // pred_fallthru
          _
      $region56: #{layer_forward.1} parent=5 // pred_fallthru
        _
    $region6: #{layer_forward.1} parent=1 // loop_footer
      %s22 = sadd.s32 1, %s18
    $region7: #{layer_forward.1} parent=1 // loop_footer_branch
      %17 = sbr.rel target = $region3
    $region8: #{layer_forward.1} parent=1 // loop_exit
      _
    %1113 = vsyncpa [#allocation4], 1
    %s1114 = scalar_lea.sflag [#allocation4], 1
    %1115 = vsyncpa %s1114, 1
    %1116 = vsyncpa [#allocation7], 1
    %s1117 = scalar_lea.sflag [#allocation7], 1
    %1118 = vsyncpa %s1117, 1
    %1119 = vsyncpa [#allocation5], 1
    %s1120 = scalar_lea.sflag [#allocation5], 1
    %1121 = vsyncpa %s1120, 1

</llo_original>
